<compile_context>
chip_gen: v6e
topology: v6e:2x2x1
jax: 0.10.0
libtpu: 0.0.40
codegen_flags: <defaults>
</compile_context>

<pallas_src>
import functools

import jax
import jax.numpy as jnp
from jax.experimental import pallas as pl
from jax.experimental.pallas import tpu as pltpu

LANE = 128
SUBLANE = 8
_PAD_LOGIT = -1e4     # finite in f16/bf16/f32; sigmoid == 0 and BCE(pad, 0) == 0


@functools.lru_cache(maxsize=1)
def _on_v7x():
    """Trace-time device check: the 2-way split only helps on v7x megacore."""
    try:
        return "v7" in jax.devices()[0].device_kind.lower()
    except Exception:  # pragma: no cover - no backend available
        return False


def _round_up(x, m):
    return (x + m - 1) // m * m


def _dice_bce_sums_kernel(pred_ref, targ_ref, out_ref, acc_ref, *,
                          tr, rows, n_inner, ragged):
    c = pl.program_id(0)
    i = pl.program_id(1)

    @pl.when(i == 0)
    def _init():
        acc_ref[...] = jnp.zeros_like(acc_ref)

    x = pred_ref[...].astype(jnp.float32)   # (tr, LANE) logits
    t = targ_ref[...].astype(jnp.float32)   # (tr, LANE) targets

    if ragged:
        # The last tile overhangs the [rows, 128] slab; neutralise garbage rows
        # so they contribute exactly 0 (no padded input copies needed).
        valid = rows - (c * n_inner + i) * tr        # >= tr for non-last tiles
        row_ids = jax.lax.broadcasted_iota(jnp.int32, (tr, LANE), 0)
        keep = row_ids < valid
        x = jnp.where(keep, x, _PAD_LOGIT)
        t = jnp.where(keep, t, 0.0)

    # Shared-exponential sigmoid + numerically stable BCE-with-logits:
    #   e = exp(-|x|); sigmoid(x) = 1/(1+e) (x>=0) or e/(1+e) (x<0)
    #   bce = max(x, 0) - x*t + log(1+e)
    e = jnp.exp(-jnp.abs(x))          # EUP, computed once
    denom = 1.0 + e
    inv = 1.0 / denom                 # exact reciprocal (keeps ~1e-6 accuracy)
    sig = jnp.where(x >= 0, inv, e * inv)
    bce = jnp.maximum(x, 0.0) - x * t + jnp.log(denom)

    # Fold rows in groups of 8 -> (8, LANE) tile-local partials (VPU-only adds),
    # folded into the accumulator once per tile.
    def fold(v):
        return jnp.sum(v.reshape(-1, SUBLANE, LANE), axis=0)

    acc_ref[0] += fold(sig * t)   # dice intersection partial
    acc_ref[1] += fold(sig)       # sum(sigmoid(x)) partial
    acc_ref[2] += fold(t)         # sum(target) partial
    acc_ref[3] += fold(bce)       # un-averaged BCE partial

    @pl.when(i == pl.num_programs(1) - 1)
    def _finalize():
        # One-shot cross-sublane reduce (XLU, free) -> tiny (4, LANE) output.
        out_ref[...] = jnp.sum(acc_ref[...], axis=1)


@functools.partial(jax.jit, static_argnames=("tile_rows",))
def dice_bce_loss_2(predicted, target, tile_rows=4096):
    """JAX/Pallas equivalent of DiceBCELoss_2.forward."""
    # Mirror the PyTorch module's shape-mismatch branch.
    if predicted.shape != target.shape:
        predicted = jnp.squeeze(predicted, axis=1)

    n_elems = predicted.size
    pred_flat = predicted.reshape(-1)
    targ_flat = target.reshape(-1)

    # Pad only up to the next 8*128 = 1024-element row-group so the flat array
    # reshapes to a lane-dense, sublane-aligned [rows, 128] slab.  Typical
    # image tensors (sizes divisible by 1024) take the zero-copy path.
    # TODO(synk): a fully copy-free ragged-tail path would need a manual-DMA
    # 1D kernel; not worth it for <=1023 trailing elements.
    padded = _round_up(max(n_elems, SUBLANE * LANE), SUBLANE * LANE)
    pad = padded - n_elems
    if pad:
        # Sentinel pad: sigmoid(-1e4) == 0 and BCE(-1e4, 0) == 0, so padded
        # elements contribute exactly 0 to every partial sum.
        pred_flat = jnp.concatenate(
            [pred_flat, jnp.full((pad,), _PAD_LOGIT, dtype=pred_flat.dtype)])
        targ_flat = jnp.concatenate(
            [targ_flat, jnp.zeros((pad,), dtype=targ_flat.dtype)])

    rows = padded // LANE                      # multiple of 8
    pred2d = pred_flat.reshape(rows, LANE)     # native dtype; cast in-kernel
    targ2d = targ_flat.reshape(rows, LANE)

    tr = min(_round_up(tile_rows, SUBLANE), rows)   # block rows (mult. of 8, <= rows)
    total_tiles = pl.cdiv(rows, tr)
    # 2-way "parallel" split only where it can help (v7x megacore) and only
    # when it divides the tile count exactly (no dead tiles, no padding).
    n_split = 2 if (_on_v7x() and total_tiles % 2 == 0) else 1
    inner = total_tiles // n_split
    ragged = (total_tiles * tr != rows)

    kernel = functools.partial(_dice_bce_sums_kernel,
                               tr=tr, rows=rows, n_inner=inner, ragged=ragged)

    cost = pl.CostEstimate(
        flops=16 * n_elems,
        transcendentals=2 * n_elems,
        bytes_accessed=(pred2d.size * pred2d.dtype.itemsize
                        + targ2d.size * targ2d.dtype.itemsize
                        + n_split * 4 * LANE * 4),
    )

    partials = pl.pallas_call(
        kernel,
        out_shape=jax.ShapeDtypeStruct((n_split, 4, LANE), jnp.float32),
        grid_spec=pltpu.PrefetchScalarGridSpec(
            num_scalar_prefetch=0,
            grid=(n_split, inner),
            in_specs=[
                pl.BlockSpec((tr, LANE), lambda c, i: (c * inner + i, 0)),
                pl.BlockSpec((tr, LANE), lambda c, i: (c * inner + i, 0)),
            ],
            out_specs=pl.BlockSpec((None, 4, LANE), lambda c, i: (c, 0, 0)),
            scratch_shapes=[pltpu.VMEM((4, SUBLANE, LANE), jnp.float32)],
        ),
        compiler_params=pltpu.CompilerParams(
            dimension_semantics=("parallel", "arbitrary")),
        cost_estimate=cost,
    )(pred2d, targ2d)

    # Tiny final combine (n_split, 4, 128) -> (4,); fuses with the scalar math.
    sums = jnp.sum(partials, axis=(0, 2))
    intersection, sum_sig, sum_t, sum_bce = sums[0], sums[1], sums[2], sums[3]

    eps = 1e-6
    dice_score = (2.0 * intersection + eps) / (sum_sig + sum_t + eps)
    dice_loss = 1.0 - dice_score
    bce_loss = sum_bce / jnp.float32(n_elems)   # BCEWithLogitsLoss mean
    return 0.25 * dice_loss + 0.75 * bce_loss


def _reference(predicted, target):
    if predicted.shape != target.shape:
        predicted = jnp.squeeze(predicted, axis=1)
    x = predicted.astype(jnp.float32)
    t = target.astype(jnp.float32)
    sig = jax.nn.sigmoid(x)
    eps = 1e-6
    inter = jnp.sum(sig * t)
    union = jnp.sum(sig) + jnp.sum(t)
    dice_loss = 1.0 - (2.0 * inter + eps) / (union + eps)
    bce = jnp.maximum(x, 0.0) - x * t + jnp.log1p(jnp.exp(-jnp.abs(x)))
    return 0.25 * dice_loss + 0.75 * jnp.mean(bce)


if __name__ == "__main__":
    key = jax.random.PRNGKey(0)
    k1, k2 = jax.random.split(key)

    # Primary case: logits [B, C, H, W] and binary targets of the same shape.
    B, C, H, W = 2, 4, 16, 16
    predicted = jax.random.normal(k1, (B, C, H, W), dtype=jnp.float32)
    target = (jax.random.uniform(k2, (B, C, H, W)) > 0.5).astype(jnp.float32)

    loss = jax.block_until_ready(dice_bce_loss_2(predicted, target))
    ref = _reference(predicted, target)
    assert jnp.allclose(loss, ref, rtol=1e-5, atol=1e-5), (loss, ref)

    # Ragged last tile (rows % tile_rows != 0) -> exercises the in-kernel mask.
    p2 = jax.random.normal(k1, (2, 4, 16, 24), dtype=jnp.float32)
    t2 = (jax.random.uniform(k2, (2, 4, 16, 24)) > 0.5).astype(jnp.float32)
    loss2 = jax.block_until_ready(dice_bce_loss_2(p2, t2, tile_rows=16))
    ref2 = _reference(p2, t2)
    assert jnp.allclose(loss2, ref2, rtol=1e-5, atol=1e-5), (loss2, ref2)

    # Size not a multiple of 1024 -> exercises the (rare) sentinel-pad path.
    p3 = jax.random.normal(k1, (2, 4, 16, 17), dtype=jnp.float32)
    t3 = (jax.random.uniform(k2, (2, 4, 16, 17)) > 0.5).astype(jnp.float32)
    loss3 = jax.block_until_ready(dice_bce_loss_2(p3, t3))
    ref3 = _reference(p3, t3)
    assert jnp.allclose(loss3, ref3, rtol=1e-5, atol=1e-5), (loss3, ref3)

    print("KERNEL_OK")
</pallas_src>

<mosaic_0001>
module attributes {stable_mosaic.version = 11 : i64} {
  func.func @_dice_bce_sums_kernel(%arg0: i32, %arg1: i32, %arg2: memref<16x128xf32, #tpu.memory_space<vmem>>, %arg3: memref<16x128xf32, #tpu.memory_space<vmem>>, %arg4: memref<1x4x128xf32, #tpu.memory_space<vmem>>, %arg5: memref<4x8x128xf32, #tpu.memory_space<vmem>>) attributes {dimension_semantics = [#tpu.dimension_semantics<parallel>, #tpu.dimension_semantics<arbitrary>], iteration_bounds = array<i64: 1, 1>, scalar_prefetch = 0 : i64, scratch_operands = 1 : i64, tpu.core_type = #tpu.core_type<tc>, window_params = [{transform_indices = @transform_0, window_bounds = array<i64: 16, 128>}, {transform_indices = @transform_1, window_bounds = array<i64: 16, 128>}, {transform_indices = @transform_2, window_bounds = array<i64: 1, 4, 128>}]} {
    %c0_i32 = arith.constant 0 : i32
    %0 = arith.cmpi eq, %arg1, %c0_i32 : i32
    %1 = arith.extui %0 : i1 to i32
    %c0_i32_0 = arith.constant 0 : i32
    %2 = arith.cmpi ne, %1, %c0_i32_0 : i32
    scf.if %2 {
      %cst_35 = arith.constant 0.000000e+00 : f32
      %59 = vector.broadcast %cst_35 : f32 to vector<4x8x128xf32>
      %c0_36 = arith.constant 0 : index
      %c0_37 = arith.constant 0 : index
      %c0_38 = arith.constant 0 : index
      %60 = vector.load %arg5[%c0_36, %c0_37, %c0_38] : memref<4x8x128xf32, #tpu.memory_space<vmem>>, vector<4x8x128xf32>
      tpu.vector_store %arg5[%c0_36, %c0_37, %c0_38], %59 {strides = array<i32>} : memref<4x8x128xf32, #tpu.memory_space<vmem>>, vector<4x8x128xf32>,
    } else {
    }
    %c0 = arith.constant 0 : index
    %c0_1 = arith.constant 0 : index
    %3 = vector.load %arg2[%c0, %c0_1] : memref<16x128xf32, #tpu.memory_space<vmem>>, vector<16x128xf32>
    %c0_2 = arith.constant 0 : index
    %c0_3 = arith.constant 0 : index
    %4 = vector.load %arg3[%c0_2, %c0_3] : memref<16x128xf32, #tpu.memory_space<vmem>>, vector<16x128xf32>
    %5 = math.absf %3 : vector<16x128xf32>
    %cst = arith.constant 0.000000e+00 : f32
    %6 = vector.broadcast %cst : f32 to vector<16x128xf32>
    %7 = arith.subf %6, %5 : vector<16x128xf32>
    %8 = math.exp %7 : vector<16x128xf32>
    %cst_4 = arith.constant 1.000000e+00 : f32
    %9 = vector.broadcast %cst_4 : f32 to vector<16x128xf32>
    %10 = arith.addf %9, %8 : vector<16x128xf32>
    %cst_5 = arith.constant 1.000000e+00 : f32
    %11 = vector.broadcast %cst_5 : f32 to vector<16x128xf32>
    %12 = arith.divf %11, %10 : vector<16x128xf32>
    %cst_6 = arith.constant 0.000000e+00 : f32
    %13 = vector.broadcast %cst_6 : f32 to vector<16x128xf32>
    %14 = arith.cmpf oge, %3, %13 : vector<16x128xf32>
    %15 = arith.mulf %8, %12 : vector<16x128xf32>
    %16 = arith.select %14, %12, %15 : vector<16x128xi1>, vector<16x128xf32>
    %cst_7 = arith.constant 0.000000e+00 : f32
    %17 = vector.broadcast %cst_7 : f32 to vector<16x128xf32>
    %18 = arith.maximumf %3, %17 : vector<16x128xf32>
    %19 = arith.mulf %3, %4 : vector<16x128xf32>
    %20 = arith.subf %18, %19 : vector<16x128xf32>
    %21 = math.log %10 : vector<16x128xf32>
    %22 = arith.addf %20, %21 : vector<16x128xf32>
    %c0_8 = arith.constant 0 : index
    %c0_9 = arith.constant 0 : index
    %c0_10 = arith.constant 0 : index
    %23 = vector.load %arg5[%c0_8, %c0_9, %c0_10] : memref<4x8x128xf32, #tpu.memory_space<vmem>>, vector<1x8x128xf32>
    %24 = vector.shape_cast %23 : vector<1x8x128xf32> to vector<8x128xf32>
    %25 = arith.mulf %16, %4 : vector<16x128xf32>
    %26 = vector.shape_cast %25 : vector<16x128xf32> to vector<2x8x128xf32>
    %cst_11 = arith.constant dense<0.000000e+00> : vector<8x128xf32>
    %27 = vector.multi_reduction <add>, %26, %cst_11 [0] : vector<2x8x128xf32> to vector<8x128xf32>
    %28 = arith.addf %24, %27 : vector<8x128xf32>
    %c0_12 = arith.constant 0 : index
    %c0_13 = arith.constant 0 : index
    %c0_14 = arith.constant 0 : index
    %29 = vector.load %arg5[%c0_12, %c0_13, %c0_14] : memref<4x8x128xf32, #tpu.memory_space<vmem>>, vector<1x8x128xf32>
    %30 = vector.shape_cast %29 : vector<1x8x128xf32> to vector<8x128xf32>
    %31 = vector.shape_cast %28 : vector<8x128xf32> to vector<1x8x128xf32>
    tpu.vector_store %arg5[%c0_12, %c0_13, %c0_14], %31 {strides = array<i32>} : memref<4x8x128xf32, #tpu.memory_space<vmem>>, vector<1x8x128xf32>,
    %c1 = arith.constant 1 : index
    %c0_15 = arith.constant 0 : index
    %c0_16 = arith.constant 0 : index
    %32 = vector.load %arg5[%c1, %c0_15, %c0_16] : memref<4x8x128xf32, #tpu.memory_space<vmem>>, vector<1x8x128xf32>
    %33 = vector.shape_cast %32 : vector<1x8x128xf32> to vector<8x128xf32>
    %34 = vector.shape_cast %16 : vector<16x128xf32> to vector<2x8x128xf32>
    %cst_17 = arith.constant dense<0.000000e+00> : vector<8x128xf32>
    %35 = vector.multi_reduction <add>, %34, %cst_17 [0] : vector<2x8x128xf32> to vector<8x128xf32>
    %36 = arith.addf %33, %35 : vector<8x128xf32>
    %c1_18 = arith.constant 1 : index
    %c0_19 = arith.constant 0 : index
    %c0_20 = arith.constant 0 : index
    %37 = vector.load %arg5[%c1_18, %c0_19, %c0_20] : memref<4x8x128xf32, #tpu.memory_space<vmem>>, vector<1x8x128xf32>
    %38 = vector.shape_cast %37 : vector<1x8x128xf32> to vector<8x128xf32>
    %39 = vector.shape_cast %36 : vector<8x128xf32> to vector<1x8x128xf32>
    tpu.vector_store %arg5[%c1_18, %c0_19, %c0_20], %39 {strides = array<i32>} : memref<4x8x128xf32, #tpu.memory_space<vmem>>, vector<1x8x128xf32>,
    %c2 = arith.constant 2 : index
    %c0_21 = arith.constant 0 : index
    %c0_22 = arith.constant 0 : index
    %40 = vector.load %arg5[%c2, %c0_21, %c0_22] : memref<4x8x128xf32, #tpu.memory_space<vmem>>, vector<1x8x128xf32>
    %41 = vector.shape_cast %40 : vector<1x8x128xf32> to vector<8x128xf32>
    %42 = vector.shape_cast %4 : vector<16x128xf32> to vector<2x8x128xf32>
    %cst_23 = arith.constant dense<0.000000e+00> : vector<8x128xf32>
    %43 = vector.multi_reduction <add>, %42, %cst_23 [0] : vector<2x8x128xf32> to vector<8x128xf32>
    %44 = arith.addf %41, %43 : vector<8x128xf32>
    %c2_24 = arith.constant 2 : index
    %c0_25 = arith.constant 0 : index
    %c0_26 = arith.constant 0 : index
    %45 = vector.load %arg5[%c2_24, %c0_25, %c0_26] : memref<4x8x128xf32, #tpu.memory_space<vmem>>, vector<1x8x128xf32>
    %46 = vector.shape_cast %45 : vector<1x8x128xf32> to vector<8x128xf32>
    %47 = vector.shape_cast %44 : vector<8x128xf32> to vector<1x8x128xf32>
    tpu.vector_store %arg5[%c2_24, %c0_25, %c0_26], %47 {strides = array<i32>} : memref<4x8x128xf32, #tpu.memory_space<vmem>>, vector<1x8x128xf32>,
    %c3 = arith.constant 3 : index
    %c0_27 = arith.constant 0 : index
    %c0_28 = arith.constant 0 : index
    %48 = vector.load %arg5[%c3, %c0_27, %c0_28] : memref<4x8x128xf32, #tpu.memory_space<vmem>>, vector<1x8x128xf32>
    %49 = vector.shape_cast %48 : vector<1x8x128xf32> to vector<8x128xf32>
    %50 = vector.shape_cast %22 : vector<16x128xf32> to vector<2x8x128xf32>
    %cst_29 = arith.constant dense<0.000000e+00> : vector<8x128xf32>
    %51 = vector.multi_reduction <add>, %50, %cst_29 [0] : vector<2x8x128xf32> to vector<8x128xf32>
    %52 = arith.addf %49, %51 : vector<8x128xf32>
    %c3_30 = arith.constant 3 : index
    %c0_31 = arith.constant 0 : index
    %c0_32 = arith.constant 0 : index
    %53 = vector.load %arg5[%c3_30, %c0_31, %c0_32] : memref<4x8x128xf32, #tpu.memory_space<vmem>>, vector<1x8x128xf32>
    %54 = vector.shape_cast %53 : vector<1x8x128xf32> to vector<8x128xf32>
    %55 = vector.shape_cast %52 : vector<8x128xf32> to vector<1x8x128xf32>
    tpu.vector_store %arg5[%c3_30, %c0_31, %c0_32], %55 {strides = array<i32>} : memref<4x8x128xf32, #tpu.memory_space<vmem>>, vector<1x8x128xf32>,
    %c0_i32_33 = arith.constant 0 : i32
    %56 = arith.cmpi eq, %arg1, %c0_i32_33 : i32
    %57 = arith.extui %56 : i1 to i32
    %c0_i32_34 = arith.constant 0 : i32
    %58 = arith.cmpi ne, %57, %c0_i32_34 : i32
    scf.if %58 {
      %c0_35 = arith.constant 0 : index
      %c0_36 = arith.constant 0 : index
      %c0_37 = arith.constant 0 : index
      %59 = vector.load %arg5[%c0_35, %c0_36, %c0_37] : memref<4x8x128xf32, #tpu.memory_space<vmem>>, vector<4x8x128xf32>
      %cst_38 = arith.constant dense<0.000000e+00> : vector<4x128xf32>
      %60 = vector.multi_reduction <add>, %59, %cst_38 [1] : vector<4x8x128xf32> to vector<4x128xf32>
      %c0_39 = arith.constant 0 : index
      %c0_40 = arith.constant 0 : index
      %c0_41 = arith.constant 0 : index
      %61 = vector.load %arg4[%c0_39, %c0_40, %c0_41] : memref<1x4x128xf32, #tpu.memory_space<vmem>>, vector<1x4x128xf32>
      %62 = vector.shape_cast %61 : vector<1x4x128xf32> to vector<4x128xf32>
      %63 = vector.shape_cast %60 : vector<4x128xf32> to vector<1x4x128xf32>
      tpu.vector_store %arg4[%c0_39, %c0_40, %c0_41], %63 {strides = array<i32>} : memref<1x4x128xf32, #tpu.memory_space<vmem>>, vector<1x4x128xf32>,
    } else {
    }
    return
  }
  func.func @transform_0(%arg0: i32, %arg1: i32) -> (i32, i32) {
    %c1_i32 = arith.constant 1 : i32
    %0 = arith.muli %arg0, %c1_i32 : i32
    %1 = arith.addi %0, %arg1 : i32
    %c0_i32 = arith.constant 0 : i32
    %c0_i32_0 = arith.constant 0 : i32
    return %1, %c0_i32 : i32, i32
  }
  func.func @transform_1(%arg0: i32, %arg1: i32) -> (i32, i32) {
    %c1_i32 = arith.constant 1 : i32
    %0 = arith.muli %arg0, %c1_i32 : i32
    %1 = arith.addi %0, %arg1 : i32
    %c0_i32 = arith.constant 0 : i32
    %c0_i32_0 = arith.constant 0 : i32
    return %1, %c0_i32 : i32, i32
  }
  func.func @transform_2(%arg0: i32, %arg1: i32) -> (i32, i32, i32) {
    %c0_i32 = arith.constant 0 : i32
    %c0_i32_0 = arith.constant 0 : i32
    %c0_i32_1 = arith.constant 0 : i32
    return %arg0, %c0_i32, %c0_i32_0 : i32, i32, i32
  }
}

</mosaic_0001>

<llo_original>
// kernel: dice_bce_loss_2.1
$region0: #{dice_bce_loss_2.1}
  #allocation0 [shape = 'u32[]', space=smem, size = 0x4, offset = 0x4, fixed_abs, tag = 'smem constant byte address 0x4 - core index']
  #allocation1 [shape = 'u32[144,128]{1,0:T(1,128)}', space=vmem, size = 0x12000, scoped, tag = 'internal scratch']
  #allocation2 [shape = 'f32[4,8,128]{2,1,0:T(8,128)}', space=vmem, size = 0x4000, scoped, tag = 'scratch operand']
  %s0 = inlined_call_operand.vmem [shape: f32[16,128], index: 0, kind: input, shape index: {}]
  %s1 = inlined_call_operand.vmem [shape: f32[16,128], index: 1, kind: input, shape index: {}]
  %s2 = inlined_call_operand.vmem [shape: f32[1,4,128], index: 2, kind: output, shape index: {}]
  %s3 = sld [smem:[#allocation0]]
  $region26: #{dice_bce_loss_2.1} parent=0
    _
  %s5 = ssub.s32 1, %s3
  %s6 = scalar_select 0, %s5, %s3
  // Predicated region
  $region2: #{dice_bce_loss_2.1} parent=0 // pred_check
    _
  $region3: #{dice_bce_loss_2.1} parent=0 // pred_check_branch
    %8 = sbr.rel (0) target = $region5
  $region4: #{dice_bce_loss_2.1} parent=0 // pred_region
    %s9 = sadd.s32 0, 0
    %s10 = smul.u32 2, %s9
    %p11 = scmp.lt.s32.totalorder %s10, 1
    %s12 = scalar_select %p11, %s10, 1
    %s13 = smul.addr %s12, 8
    %s14 = scalar_lea.vmem %s0, %s13
    %s15 = sadd.s32 0, 0
    %s16 = smul.u32 2, %s15
  $region5: #{dice_bce_loss_2.1} parent=0 // pred_fallthru
    _
  // Predicated region
  $region6: #{dice_bce_loss_2.1} parent=0 // pred_check
    _
  $region7: #{dice_bce_loss_2.1} parent=0 // pred_check_branch
    %18 = sbr.rel (0) target = $region9
  $region8: #{dice_bce_loss_2.1} parent=0 // pred_region
    %s19 = sadd.s32 0, 0
    %s20 = smul.u32 2, %s19
    %p21 = scmp.lt.s32.totalorder %s20, 1
    %s22 = scalar_select %p21, %s20, 1
    %s23 = smul.addr %s22, 8
    %s24 = scalar_lea.vmem %s1, %s23
    %s25 = sadd.s32 0, 0
    %s26 = smul.u32 2, %s25
  $region9: #{dice_bce_loss_2.1} parent=0 // pred_fallthru
    _
  %s27 = sadd.s32 0, 0
  %s28 = smul.u32 2, %s27
  %p29 = scmp.lt.s32.totalorder %s28, 1
  %s30 = scalar_select %p29, %s28, 1
  %s31 = smul.addr %s30, 8
  %s32 = scalar_lea.vmem %s0, %s31
  %s33 = sadd.s32 0, 0
  %s34 = smul.u32 2, %s33
  %p35 = scmp.lt.s32.totalorder %s34, 1
  %s36 = scalar_select %p35, %s34, 1
  %s37 = smul.addr %s36, 8
  %s38 = scalar_lea.vmem %s1, %s37
  %s39 = sadd.s32 0, 0
  %s40 = smul.u32 2, %s39
  %p41 = scmp.lt.s32.totalorder %s40, 1
  %s42 = scalar_select %p41, %s40, 1
  %s43 = smul.addr %s42, 8
  %s44 = scalar_lea.vmem %s0, %s43
  %s45 = sadd.s32 0, 0
  %s46 = smul.u32 2, %s45
  %s47 = sadd.s32 0, 0
  %s48 = smul.u32 2, %s47
  %p49 = scmp.lt.s32.totalorder %s48, 1
  %s50 = scalar_select %p49, %s48, 1
  %s51 = smul.addr %s50, 8
  %s52 = scalar_lea.vmem %s1, %s51
  %s53 = sadd.s32 0, 0
  %s54 = smul.u32 2, %s53
  %p55 = scmp.eq.s32.totalorder 0, 0
  // Predicated region
  $region10: #{dice_bce_loss_2.1} parent=0 // pred_check
    %p56 = pneg %p55
  $region11: #{dice_bce_loss_2.1} parent=0 // pred_check_branch
    %58 = sbr.rel (%p56) target = $region13
  $region12: #{dice_bce_loss_2.1} parent=0 // pred_region
    %59 = vst [vmem:[#allocation2] sm:$0xff] 0.0
    %60 = vst [vmem:[#allocation2 + $0x8] sm:$0xff] 0.0
    %61 = vst [vmem:[#allocation2 + $0x10] sm:$0xff] 0.0
    %62 = vst [vmem:[#allocation2 + $0x18] sm:$0xff] 0.0
  $region13: #{dice_bce_loss_2.1} parent=0 // pred_fallthru
    _
  %v63 = vld [vmem:[%s44] sm:$0xff]
  %v64 = vld [vmem:[%s44 + $0x8] sm:$0xff]
  %v65 = vld [vmem:[%s52] sm:$0xff]
  %v66 = vld [vmem:[%s52 + $0x8] sm:$0xff]
  %v67 = vand.u32 2147483647, %v63
  %v68 = vand.u32 2147483647, %v64
  %v69 = vsub.f32 0.0, %v67
  %v70 = vsub.f32 0.0, %v68
  %v71 = vmul.f32 %v69, 1.442695
  %v72 = vpow.pop %v71
  %v73 = vmul.f32 %v70, 1.442695
  %v74 = vpow.pop %v73
  %v75 = vadd.f32 %v72, 1.0
  %v76 = vadd.f32 %v74, 1.0
  %v77 = vrcp.pop %v75
  %v78 = vmul.f32 1.0, %v77
  %v79 = vrcp.pop %v76
  %v80 = vmul.f32 1.0, %v79
  %vm81 = vcmp.ge.f32.partialorder %v63, 0.0
  %vm82 = vcmp.ge.f32.partialorder %v64, 0.0
  %v83 = vmul.f32 %v72, %v78
  %v84 = vmul.f32 %v74, %v80
  %v85 = vsel %vm81, %v78, %v83
  %v86 = vsel %vm82, %v80, %v84
  %v87 = vmax.f32 %v63, 0.0
  %v88 = vmax.f32 %v64, 0.0
  %v89 = vmul.f32 %v63, %v65
  %v90 = vmul.f32 %v64, %v66
  %v91 = vsub.f32 %v87, %v89
  %v92 = vsub.f32 %v88, %v90
  %v93 = vlog2.pop %v75
  %v94 = vmul.f32 %v93, 0.6931472
  %v95 = vlog2.pop %v76
  %v96 = vmul.f32 %v95, 0.6931472
  %v97 = vadd.f32 %v91, %v94
  %v98 = vadd.f32 %v92, %v96
  %v99 = vld [vmem:[#allocation2] sm:$0xff]
  %v100 = vmul.f32 %v85, %v65
  %v101 = vmul.f32 %v86, %v66
  %v102 = vadd.f32 %v100, %v101
  %v103 = vadd.f32 %v99, %v102
  %104 = vst [vmem:[#allocation2] sm:$0xff] %v103
  %s105 = scalar_lea.vmem [#allocation2], 8
  %v106 = vld [vmem:[%s105] sm:$0xff]
  %v107 = vadd.f32 %v85, %v86
  %v108 = vadd.f32 %v106, %v107
  %109 = vst [vmem:[%s105] sm:$0xff] %v108
  %s110 = scalar_lea.vmem [#allocation2], 16
  %v111 = vld [vmem:[%s110] sm:$0xff]
  %v112 = vadd.f32 %v65, %v66
  %v113 = vadd.f32 %v111, %v112
  %114 = vst [vmem:[%s110] sm:$0xff] %v113
  %s115 = scalar_lea.vmem [#allocation2], 24
  %v116 = vld [vmem:[%s115] sm:$0xff]
  %v117 = vadd.f32 %v97, %v98
  %v118 = vadd.f32 %v116, %v117
  %119 = vst [vmem:[%s115] sm:$0xff] %v118
  // Predicated region
  $region14: #{dice_bce_loss_2.1} parent=0 // pred_check
    %p120 = pneg %p55
  $region15: #{dice_bce_loss_2.1} parent=0 // pred_check_branch
    %122 = sbr.rel (%p120) target = $region17
  $region16: #{dice_bce_loss_2.1} parent=0 // pred_region
    %v123 = vld [vmem:[#allocation2] sm:$0xff]
    %v124 = vld [vmem:[#allocation2 + $0x8] sm:$0xff]
    %v125 = vld [vmem:[#allocation2 + $0x10] sm:$0xff]
    %v126 = vld [vmem:[#allocation2 + $0x18] sm:$0xff]
    %v127 = vrot.slane %v123, 4
    %v128 = vadd.f32 %v123, %v127
    %v129 = vrot.slane %v128, 2
    %v130 = vadd.f32 %v128, %v129
    %v131 = vrot.slane %v130, 1
    %v132 = vadd.f32 %v130, %v131
    %v133 = vrot.slane %v124, 4
    %v134 = vadd.f32 %v124, %v133
    %v135 = vrot.slane %v134, 2
    %v136 = vadd.f32 %v134, %v135
    %v137 = vrot.slane %v136, 1
    %v138 = vadd.f32 %v136, %v137
    %v139 = vrot.slane %v125, 4
    %v140 = vadd.f32 %v125, %v139
    %v141 = vrot.slane %v140, 2
    %v142 = vadd.f32 %v140, %v141
    %v143 = vrot.slane %v142, 1
    %v144 = vadd.f32 %v142, %v143
    %v145 = vrot.slane %v126, 4
    %v146 = vadd.f32 %v126, %v145
    %v147 = vrot.slane %v146, 2
    %v148 = vadd.f32 %v146, %v147
    %v149 = vrot.slane %v148, 1
    %v150 = vadd.f32 %v148, %v149
    %vm155 = vcmask 1041409
    %v156 = vsel %vm155, %v138, %v132
    %vm157 = vcmask 1042434
    %v158 = vsel %vm157, %v144, %v156
    %vm159 = vcmask 1043459
    %v160 = vsel %vm159, %v150, %v158
    %162 = vst [vmem:[%s2] sm:$0xf] %v160
  $region17: #{dice_bce_loss_2.1} parent=0 // pred_fallthru
    _
  // Predicated region
  $region18: #{dice_bce_loss_2.1} parent=0 // pred_check
    _
  $region19: #{dice_bce_loss_2.1} parent=0 // pred_check_branch
    %164 = sbr.rel (0) target = $region21
  $region20: #{dice_bce_loss_2.1} parent=0 // pred_region
    _
  $region21: #{dice_bce_loss_2.1} parent=0 // pred_fallthru
    _
  // Predicated region
  $region22: #{dice_bce_loss_2.1} parent=0 // pred_check
    _
  $region23: #{dice_bce_loss_2.1} parent=0 // pred_check_branch
    %166 = sbr.rel (0) target = $region25
  $region24: #{dice_bce_loss_2.1} parent=0 // pred_region
    _
  $region25: #{dice_bce_loss_2.1} parent=0 // pred_fallthru
    _

</llo_original>
